<compile_context>
chip_gen: v7x
topology: tpu7x:2x2x1
jax: 0.10.0
libtpu: 0.0.40
codegen_flags: <defaults>
</compile_context>

<pallas_src>
import functools

import numpy as np
import jax
import jax.numpy as jnp
from jax.experimental import pallas as pl
from jax.experimental.pallas import tpu as pltpu

_EPS = 1e-6          # F.pairwise_distance eps
_NORM_EPS = 1e-12    # F.normalize eps
_BIG = 1e30          # finite sentinel for dropped keys (safer than inf)


def _round_up(x, m):
    return (x + m - 1) // m * m


# ---------------------------------------------------------------------------
# K0: L2-normalize rows, append a trailing "ones" lane, emit bf16 only.
# ---------------------------------------------------------------------------
def _normalize_kernel(f_ref, fn16_ref):
    x = f_ref[...]
    inv = jax.lax.rsqrt(jnp.maximum(jnp.sum(x * x, axis=1, keepdims=True),
                                    jnp.float32(_NORM_EPS * _NORM_EPS)))
    fn = x * inv
    lane = jax.lax.broadcasted_iota(jnp.int32, fn.shape, 1)
    fn = jnp.where(lane == fn.shape[1] - 1, jnp.float32(1.0), fn)
    fn16_ref[...] = fn.astype(jnp.bfloat16)


# ---------------------------------------------------------------------------
# K1: per-row-tile class sums/counts + transposed augmented centroid table.
# ---------------------------------------------------------------------------
def _class_stats_kernel(lab_col_ref, lab_row_ref, fn16_ref, csum_ref, caugT_ref):
    dp = csum_ref.shape[1]
    same = lab_col_ref[...] == lab_row_ref[...]                    # (TM, Bp) bool
    same_bf = jnp.where(same, jnp.bfloat16(1.0), jnp.bfloat16(0.0))  # single select
    csum = jnp.dot(same_bf, fn16_ref[...],
                   preferred_element_type=jnp.float32)             # (TM, Dp)
    csum_ref[...] = csum

    counts = csum[:, dp - 1:dp]                 # exact integer counts >= 1
    centroid = csum / counts                    # exact divide; ones lane == 1.0
    cn2 = jnp.sum(centroid * centroid, axis=1, keepdims=True) - 1.0
    cs = jnp.sum(centroid, axis=1, keepdims=True) - 1.0
    kconst = cn2 - 2.0 * jnp.float32(_EPS) * cs                    # per-centroid const
    lane = jax.lax.broadcasted_iota(jnp.int32, centroid.shape, 1)
    caug = jnp.where(lane == dp - 1, kconst, -2.0 * centroid)      # (TM, Dp) f32
    caugT_ref[...] = jnp.transpose(caug).astype(jnp.bfloat16)      # (Dp, TM) bf16


# ---------------------------------------------------------------------------
# K2: per-row loss, reduced in-kernel to per-tile (sum(loss), sum(valid)).
# ---------------------------------------------------------------------------
def _loss_kernel(invtau_ref, lab_col_ref, lab_row_ref, f_ref, csum_ref,
                 caugT_ref, sums_ref, *, d_real, n_real):
    eps = jnp.float32(_EPS)
    dp = f_ref.shape[1]

    # Recompute normalization of this raw row tile in-register (EUP rsqrt).
    x = f_ref[...]
    inv = jax.lax.rsqrt(jnp.maximum(jnp.sum(x * x, axis=1, keepdims=True),
                                    jnp.float32(_NORM_EPS * _NORM_EPS)))
    lane = jax.lax.broadcasted_iota(jnp.int32, x.shape, 1)
    f32 = jnp.where(lane == dp - 1, jnp.float32(1.0), x * inv)     # (TM, Dp)
    f16 = f32.astype(jnp.bfloat16)

    csum = csum_ref[...]
    lab_c = lab_col_ref[...]                                       # (TM, 1)
    lab_r = lab_row_ref[...]                                       # (1, Bp)

    # ---- positive (leave-one-out) centroid and d_p (exact f32 divides) ----
    counts = csum[:, dp - 1:dp]
    pos_cnt = jnp.maximum(counts - 1.0, 1.0)
    c_p = (csum - f32) / pos_cnt
    diffp = f32 - c_p + eps
    d_p = jnp.sqrt(jnp.sum(diffp * diffp, axis=1, keepdims=True))  # (TM, 1)

    # ---- distances to every class centroid via one bf16 MXU matmul ----
    # ||f - c + eps||^2 = (1 + 2*eps*sum(f) + D*eps^2)              [query part]
    #                   + (-2 f.c + |c|^2 - 2*eps*sum(c))           [caug_T part]
    row_sum = jnp.sum(f32, axis=1, keepdims=True) - 1.0            # drop ones lane
    q_const = 1.0 + 2.0 * eps * row_sum + jnp.float32(d_real) * eps * eps
    cross = jnp.dot(f16, caugT_ref[...],
                    preferred_element_type=jnp.float32)            # (TM, Bp)
    dist_sq = cross + q_const
    drop = jnp.logical_or(lab_c == lab_r, lab_r < 0)               # same class / pad
    dist_sq = jnp.where(drop, jnp.float32(_BIG), dist_sq)
    d_n = jnp.sqrt(jnp.maximum(jnp.min(dist_sq, axis=1, keepdims=True), 0.0))

    # ---- validity mask (mirrors the reference `continue` branches) ----
    valid = jnp.logical_and(
        lab_c >= 0,
        jnp.logical_and(counts > 1.5, counts < jnp.float32(n_real) - 0.5))
    valid_f = valid.astype(jnp.float32)

    # ---- stable softplus((d_p - d_n) / tau) + in-kernel tile reduction ----
    z = (d_p - d_n) * invtau_ref[0, 0]
    softplus = jnp.maximum(z, 0.0) + jnp.log(1.0 + jnp.exp(-jnp.abs(z)))
    loss_sum = jnp.sum(softplus * valid_f)
    valid_sum = jnp.sum(valid_f)

    out_lane = jax.lax.broadcasted_iota(jnp.int32, (1, 128), 1)
    out = jnp.where(out_lane == 0, loss_sum,
                    jnp.where(out_lane == 1, valid_sum, jnp.float32(0.0)))
    sums_ref[...] = out.reshape(sums_ref.shape)                    # lane-dense store


# ---------------------------------------------------------------------------
# Wrapper
# ---------------------------------------------------------------------------
def _device_kind():
    try:
        return jax.devices()[0].device_kind.lower()
    except Exception:
        return ""


def _pick_tile_rows(B, tile_rows):
    if tile_rows is not None:
        return max(128, _round_up(int(tile_rows), 128))
    kind = _device_kind()
    # 128-wide MXU generations prefer TM=128; v6e/v7x prefer the 256x256 MXU.
    prefer = 128 if any(t in kind for t in ("v2", "v3", "v4", "v5")) else 256
    if _round_up(B, 128) < _round_up(B, prefer):   # minimize row padding
        return 128
    return prefer


def _vmem_limit_bytes(Bp, Dp, TM):
    full_bf16 = Bp * Dp * 2            # resident fn16 (K1) / caug_T (K2) table
    row_f32 = TM * Dp * 4
    row_bf16 = TM * Dp * 2
    # Worst-case per-call footprint with default double-buffering.
    k1 = 2 * full_bf16 + 2 * row_f32 + 2 * row_bf16 + 4 * (Bp + TM) * 4
    k2 = 2 * full_bf16 + 4 * row_f32 + 4 * (Bp + TM) * 4 + 2 * 128 * 4
    need = max(k1, k2)
    kind = _device_kind()
    cap = (48 * 1024 * 1024 if ("v7" in kind or "7x" in kind)
           else 100 * 1024 * 1024)     # v5e/v6e have 128 MiB physical VMEM
    return int(min(cap, max(32 * 1024 * 1024, int(need * 1.5) + (4 << 20))))


def centroid_loss_exponential(features, labels, epoch, weight=1.0,
                              temperature=0.3, tile_rows=None):
    features = jnp.asarray(features, jnp.float32)
    labels = jnp.asarray(labels, jnp.int32)
    B, D = features.shape

    Dp = _round_up(D + 1, 128)          # +1 spare lane for the ones / const aug
    TM = _pick_tile_rows(B, tile_rows)
    Bp = _round_up(B, TM)
    G = Bp // TM

    f_pad = jnp.zeros((Bp, Dp), jnp.float32).at[:B, :D].set(features)
    lab_pad = jnp.full((Bp,), -1, jnp.int32).at[:B].set(labels)
    lab_col = lab_pad.reshape(Bp, 1)
    lab_row = lab_pad.reshape(1, Bp)

    tau = jnp.minimum(jnp.float32(temperature)
                      + 0.02 * jnp.asarray(epoch, jnp.float32), jnp.float32(1.0))
    inv_tau = (1.0 / tau).astype(jnp.float32).reshape(1, 1)

    cparams = pltpu.CompilerParams(
        dimension_semantics=("parallel",),
        vmem_limit_bytes=_vmem_limit_bytes(Bp, Dp, TM))

    row_tile = pl.BlockSpec((TM, Dp), lambda i: (i, 0))
    col_tile = pl.BlockSpec((TM, 1), lambda i: (i, 0))
    full_lab_row = pl.BlockSpec((1, Bp), lambda i: (0, 0))
    full_fn16 = pl.BlockSpec((Bp, Dp), lambda i: (0, 0))
    full_caugT = pl.BlockSpec((Dp, Bp), lambda i: (0, 0))
    caugT_tile = pl.BlockSpec((Dp, TM), lambda i: (0, i))
    smem_scalar = pl.BlockSpec(memory_space=pltpu.MemorySpace.SMEM)
    sums_tile = pl.BlockSpec((1, 1, 128), lambda i: (i, 0, 0))

    # ---- K0: normalize -> bf16 table with ones lane (only intermediate) ----
    fn16 = pl.pallas_call(
        _normalize_kernel,
        grid=(G,),
        in_specs=[row_tile],
        out_specs=row_tile,
        out_shape=jax.ShapeDtypeStruct((Bp, Dp), jnp.bfloat16),
        compiler_params=cparams,
    )(f_pad)

    # ---- K1: class sums/counts + transposed augmented centroid table ----
    class_sum, caug_t = pl.pallas_call(
        _class_stats_kernel,
        grid=(G,),
        in_specs=[col_tile, full_lab_row, full_fn16],
        out_specs=[row_tile, caugT_tile],
        out_shape=[jax.ShapeDtypeStruct((Bp, Dp), jnp.float32),
                   jax.ShapeDtypeStruct((Dp, Bp), jnp.bfloat16)],
        compiler_params=cparams,
    )(lab_col, lab_row, fn16)

    # ---- K2: fused normalization + loss, per-tile partial sums ----
    sums = pl.pallas_call(
        functools.partial(_loss_kernel, d_real=D, n_real=B),
        grid=(G,),
        in_specs=[smem_scalar, col_tile, full_lab_row, row_tile, row_tile,
                  full_caugT],
        out_specs=sums_tile,
        out_shape=jax.ShapeDtypeStruct((G, 1, 128), jnp.float32),
        compiler_params=cparams,
    )(inv_tau, lab_col, lab_row, f_pad, class_sum, caug_t)

    total = jnp.sum(sums[:, 0, 0])
    n_valid = jnp.sum(sums[:, 0, 1])
    mean_loss = jnp.where(n_valid > 0.0, total / jnp.maximum(n_valid, 1.0), 0.0)
    return jnp.float32(weight) * mean_loss


# ---------------------------------------------------------------------------
# Reference (NumPy transcription of the PyTorch forward) + self-check
# ---------------------------------------------------------------------------
def _reference_loss(features, labels, epoch, weight=1.0, temperature=0.3):
    f = np.asarray(features, dtype=np.float64)
    norms = np.linalg.norm(f, axis=1, keepdims=True)
    f = f / np.maximum(norms, 1e-12)
    labels = np.asarray(labels)
    B = f.shape[0]
    uniq = np.unique(labels)
    centroids = {int(l): f[labels == l].mean(axis=0) for l in uniq}
    eps = 1e-6
    loss, count = 0.0, 0
    for i in range(B):
        l = int(labels[i])
        idx = np.nonzero(labels == l)[0]
        if idx.size <= 1:
            continue
        pos_idx = idx[idx != i]
        c_p = f[pos_idx].mean(axis=0)
        d_p = np.linalg.norm(f[i] - c_p + eps)
        neg = [centroids[int(nl)] for nl in uniq if int(nl) != l]
        if not neg:
            continue
        d_n = min(np.linalg.norm(f[i] - c + eps) for c in neg)
        tau = min(temperature + 0.02 * epoch, 1.0)
        loss += np.log1p(np.exp((d_p - d_n) / tau))
        count += 1
    loss = loss / count if count > 0 else 0.0
    return weight * loss


if __name__ == "__main__":
    key = jax.random.PRNGKey(0)
    cases = [
        # (B, D), labels, epoch
        ((8, 32), jnp.array([0, 0, 0, 1, 1, 2, 2, 2], dtype=jnp.int32), 5),
        # exercises D != 32, row padding and the singleton-class skip
        ((12, 40), jnp.array([0, 0, 0, 0, 1, 1, 1, 3, 3, 5, 5, 7], dtype=jnp.int32), 12),
    ]
    for idx, ((b, d), labels, epoch) in enumerate(cases):
        key, sub = jax.random.split(key)
        features = jax.random.normal(sub, (b, d), dtype=jnp.float32)
        loss = centroid_loss_exponential(features, labels, epoch,
                                         weight=1.0, temperature=0.3)
        loss = jax.block_until_ready(loss)
        ref = _reference_loss(np.asarray(features), np.asarray(labels), epoch, 1.0, 0.3)
        assert np.isfinite(float(loss)), (idx, float(loss))
        assert abs(float(loss) - ref) < 3e-2, (idx, float(loss), ref)
    print("KERNEL_OK")
</pallas_src>

<mosaic_0001>
module attributes {stable_mosaic.version = 11 : i64} {
  func.func @_normalize_kernel(%arg0: i32, %arg1: memref<128x128xf32, #tpu.memory_space<vmem>>, %arg2: memref<128x128xbf16, #tpu.memory_space<vmem>>) attributes {dimension_semantics = [#tpu.dimension_semantics<parallel>], iteration_bounds = array<i64: 1>, scalar_prefetch = 0 : i64, scratch_operands = 0 : i64, tpu.core_type = #tpu.core_type<tc>, window_params = [{transform_indices = @transform_0, window_bounds = array<i64: 128, 128>}, {transform_indices = @transform_1, window_bounds = array<i64: 128, 128>}]} {
    %c0 = arith.constant 0 : index
    %c0_0 = arith.constant 0 : index
    %0 = vector.load %arg1[%c0, %c0_0] : memref<128x128xf32, #tpu.memory_space<vmem>>, vector<128x128xf32>
    %1 = arith.mulf %0, %0 : vector<128x128xf32>
    %cst = arith.constant dense<0.000000e+00> : vector<128xf32>
    %2 = vector.multi_reduction <add>, %1, %cst [1] : vector<128x128xf32> to vector<128xf32>
    %3 = vector.shape_cast %2 : vector<128xf32> to vector<128x1xf32>
    %cst_1 = arith.constant 1.000000e-24 : f32
    %4 = vector.broadcast %cst_1 : f32 to vector<128x1xf32>
    %5 = arith.maximumf %3, %4 : vector<128x1xf32>
    %6 = math.rsqrt %5 : vector<128x1xf32>
    %7 = vector.broadcast %6 : vector<128x1xf32> to vector<128x128xf32>
    %8 = arith.mulf %0, %7 : vector<128x128xf32>
    %9 = tpu.iota {dimensions = array<i32: 1>} : vector<128x128xi32>
    %c127_i32 = arith.constant 127 : i32
    %10 = vector.broadcast %c127_i32 : i32 to vector<128x128xi32>
    %11 = arith.cmpi eq, %9, %10 : vector<128x128xi32>
    %cst_2 = arith.constant 1.000000e+00 : f32
    %12 = vector.broadcast %cst_2 : f32 to vector<128x128xf32>
    %13 = arith.select %11, %12, %8 : vector<128x128xi1>, vector<128x128xf32>
    %14 = arith.truncf %13 : vector<128x128xf32> to vector<128x128xbf16>
    %c0_3 = arith.constant 0 : index
    %c0_4 = arith.constant 0 : index
    %15 = vector.load %arg2[%c0_3, %c0_4] : memref<128x128xbf16, #tpu.memory_space<vmem>>, vector<128x128xbf16>
    tpu.vector_store %arg2[%c0_3, %c0_4], %14 {strides = array<i32>} : memref<128x128xbf16, #tpu.memory_space<vmem>>, vector<128x128xbf16>,
    return
  }
  func.func @transform_0(%arg0: i32) -> (i32, i32) {
    %c0_i32 = arith.constant 0 : i32
    %c0_i32_0 = arith.constant 0 : i32
    return %arg0, %c0_i32 : i32, i32
  }
  func.func @transform_1(%arg0: i32) -> (i32, i32) {
    %c0_i32 = arith.constant 0 : i32
    %c0_i32_0 = arith.constant 0 : i32
    return %arg0, %c0_i32 : i32, i32
  }
}

</mosaic_0001>

<llo_original>
// kernel: tpu_custom_call.1
$region0: #{tpu_custom_call.1}
  #allocation0 [shape = 'u32[]', space=smem, size = 0x4, offset = 0x4, fixed_abs, tag = 'smem constant byte address 0x4 - core index']
  #allocation1 [shape = 'u32[144,128]{1,0:T(1,128)}', space=vmem, size = 0x12000, scoped, tag = 'internal scratch']
  %s0 = inlined_call_operand.hbm [shape: f32[128,128], index: 0, kind: input, shape index: {}]
  %s1 = inlined_call_operand.hbm [shape: bf16[128,128], index: 1, kind: output, shape index: {}]
  %s2 = sld [smem:[#allocation0]]
  $region18: #{tpu_custom_call.1} parent=0
    _
  %s4 = ssub.s32 1, %s2
  %s5 = scalar_select 0, %s4, %s2
  $region1: #{tpu_custom_call.1} parent=0
    #allocation2 [shape = 'u8[65536]{0}', space=vmem, size = 0x10000, scoped, tag = 'input window, operand 0, single buffered']
    #allocation3 [shape = 's32[1]{0}', space=sflag, size = 0x4, scoped, tag = 'scoped memory for tpu_custom_call.1']
    #allocation4 [shape = 's32[1]{0}', space=sflag, size = 0x4, scoped, tag = 'scoped memory for tpu_custom_call.1']
    #allocation5 [shape = 'u8[32768]{0}', space=vmem, size = 0x8000, scoped, tag = 'output window, operand 0, single buffered']
    %6 = vsyncpa [#allocation3], 0
    %7 = vsyncpa [#allocation4], 0
    // Predicated region
    $region2: #{tpu_custom_call.1} parent=1 // pred_check
      _
    $region3: #{tpu_custom_call.1} parent=1 // pred_check_branch
      %9 = sbr.rel (0) target = $region5
    $region4: #{tpu_custom_call.1} parent=1 // pred_region
      %s11 = ssub.s32 2048, 2048
      %12 = vsyncadd [#allocation3], %s11
      %s13 = sshll.u32 [#allocation2], 4
      %s14 = int_to_ptr.vmem [resolvable:$true] %s13
      %19 = dma.hbm_to_vmem [thread:$0]  %s0, 2048, %s14, [#allocation3], 128, 128, 8
    $region5: #{tpu_custom_call.1} parent=1 // pred_fallthru
      _
    // Predicated region
    $region6: #{tpu_custom_call.1} parent=1 // pred_check
      _
    $region7: #{tpu_custom_call.1} parent=1 // pred_check_branch
      %21 = sbr.rel (0) target = $region9
    $region8: #{tpu_custom_call.1} parent=1 // pred_region
      %22 = dma.done [#allocation3], 2048
    $region9: #{tpu_custom_call.1} parent=1 // pred_fallthru
      _
    %v23 = vld [vmem:[#allocation2] sm:$0xff]
    %v24 = vld [vmem:[#allocation2 + $0x8] sm:$0xff]
    %v25 = vld [vmem:[#allocation2 + $0x10] sm:$0xff]
    %v26 = vld [vmem:[#allocation2 + $0x18] sm:$0xff]
    %v27 = vld [vmem:[#allocation2 + $0x20] sm:$0xff]
    %v28 = vld [vmem:[#allocation2 + $0x28] sm:$0xff]
    %v29 = vld [vmem:[#allocation2 + $0x30] sm:$0xff]
    %v30 = vld [vmem:[#allocation2 + $0x38] sm:$0xff]
    %v31 = vld [vmem:[#allocation2 + $0x40] sm:$0xff]
    %v32 = vld [vmem:[#allocation2 + $0x48] sm:$0xff]
    %v33 = vld [vmem:[#allocation2 + $0x50] sm:$0xff]
    %v34 = vld [vmem:[#allocation2 + $0x58] sm:$0xff]
    %v35 = vld [vmem:[#allocation2 + $0x60] sm:$0xff]
    %v36 = vld [vmem:[#allocation2 + $0x68] sm:$0xff]
    %v37 = vld [vmem:[#allocation2 + $0x70] sm:$0xff]
    %v38 = vld [vmem:[#allocation2 + $0x78] sm:$0xff]
    %v39 = vmul.f32 %v23, %v23
    %v40 = vmul.f32 %v24, %v24
    %v41 = vmul.f32 %v25, %v25
    %v42 = vmul.f32 %v26, %v26
    %v43 = vmul.f32 %v27, %v27
    %v44 = vmul.f32 %v28, %v28
    %v45 = vmul.f32 %v29, %v29
    %v46 = vmul.f32 %v30, %v30
    %v47 = vmul.f32 %v31, %v31
    %v48 = vmul.f32 %v32, %v32
    %v49 = vmul.f32 %v33, %v33
    %v50 = vmul.f32 %v34, %v34
    %v51 = vmul.f32 %v35, %v35
    %v52 = vmul.f32 %v36, %v36
    %v53 = vmul.f32 %v37, %v37
    %v54 = vmul.f32 %v38, %v38
    %55 = vadd.xlane.f32.xlu0 %v39
    %v56 = vpop.xlane.xlu0 %55
    %57 = vadd.xlane.f32.xlu0 %v40
    %v58 = vpop.xlane.xlu0 %57
    %59 = vadd.xlane.f32.xlu0 %v41
    %v60 = vpop.xlane.xlu0 %59
    %61 = vadd.xlane.f32.xlu0 %v42
    %v62 = vpop.xlane.xlu0 %61
    %63 = vadd.xlane.f32.xlu0 %v43
    %v64 = vpop.xlane.xlu0 %63
    %65 = vadd.xlane.f32.xlu0 %v44
    %v66 = vpop.xlane.xlu0 %65
    %67 = vadd.xlane.f32.xlu0 %v45
    %v68 = vpop.xlane.xlu0 %67
    %69 = vadd.xlane.f32.xlu0 %v46
    %v70 = vpop.xlane.xlu0 %69
    %71 = vadd.xlane.f32.xlu0 %v47
    %v72 = vpop.xlane.xlu0 %71
    %73 = vadd.xlane.f32.xlu0 %v48
    %v74 = vpop.xlane.xlu0 %73
    %75 = vadd.xlane.f32.xlu0 %v49
    %v76 = vpop.xlane.xlu0 %75
    %77 = vadd.xlane.f32.xlu0 %v50
    %v78 = vpop.xlane.xlu0 %77
    %79 = vadd.xlane.f32.xlu0 %v51
    %v80 = vpop.xlane.xlu0 %79
    %81 = vadd.xlane.f32.xlu0 %v52
    %v82 = vpop.xlane.xlu0 %81
    %83 = vadd.xlane.f32.xlu0 %v53
    %v84 = vpop.xlane.xlu0 %83
    %85 = vadd.xlane.f32.xlu0 %v54
    %v86 = vpop.xlane.xlu0 %85
    %v87 = vmax.f32 %v56, 1e-24
    %v88 = vmax.f32 %v58, 1e-24
    %v89 = vmax.f32 %v60, 1e-24
    %v90 = vmax.f32 %v62, 1e-24
    %v91 = vmax.f32 %v64, 1e-24
    %v92 = vmax.f32 %v66, 1e-24
    %v93 = vmax.f32 %v68, 1e-24
    %v94 = vmax.f32 %v70, 1e-24
    %v95 = vmax.f32 %v72, 1e-24
    %v96 = vmax.f32 %v74, 1e-24
    %v97 = vmax.f32 %v76, 1e-24
    %v98 = vmax.f32 %v78, 1e-24
    %v99 = vmax.f32 %v80, 1e-24
    %v100 = vmax.f32 %v82, 1e-24
    %v101 = vmax.f32 %v84, 1e-24
    %v102 = vmax.f32 %v86, 1e-24
    %v103 = vrsqrt.pop %v87
    %v104 = vrsqrt.pop %v88
    %v105 = vrsqrt.pop %v89
    %v106 = vrsqrt.pop %v90
    %v107 = vrsqrt.pop %v91
    %v108 = vrsqrt.pop %v92
    %v109 = vrsqrt.pop %v93
    %v110 = vrsqrt.pop %v94
    %v111 = vrsqrt.pop %v95
    %v112 = vrsqrt.pop %v96
    %v113 = vrsqrt.pop %v97
    %v114 = vrsqrt.pop %v98
    %v115 = vrsqrt.pop %v99
    %v116 = vrsqrt.pop %v100
    %v117 = vrsqrt.pop %v101
    %v118 = vrsqrt.pop %v102
    %v119 = vmul.f32 %v23, %v103
    %v120 = vmul.f32 %v24, %v104
    %v121 = vmul.f32 %v25, %v105
    %v122 = vmul.f32 %v26, %v106
    %v123 = vmul.f32 %v27, %v107
    %v124 = vmul.f32 %v28, %v108
    %v125 = vmul.f32 %v29, %v109
    %v126 = vmul.f32 %v30, %v110
    %v127 = vmul.f32 %v31, %v111
    %v128 = vmul.f32 %v32, %v112
    %v129 = vmul.f32 %v33, %v113
    %v130 = vmul.f32 %v34, %v114
    %v131 = vmul.f32 %v35, %v115
    %v132 = vmul.f32 %v36, %v116
    %v133 = vmul.f32 %v37, %v117
    %v134 = vmul.f32 %v38, %v118
    %v135 = vlaneseq
    %v136 = vand.u32 %v135, 127
    %vm137 = vcmp.eq.s32.totalorder %v136, 127
    %v138 = vsel %vm137, 1.0, %v119
    %v139 = vsel %vm137, 1.0, %v120
    %v140 = vsel %vm137, 1.0, %v121
    %v141 = vsel %vm137, 1.0, %v122
    %v142 = vsel %vm137, 1.0, %v123
    %v143 = vsel %vm137, 1.0, %v124
    %v144 = vsel %vm137, 1.0, %v125
    %v145 = vsel %vm137, 1.0, %v126
    %v146 = vsel %vm137, 1.0, %v127
    %v147 = vsel %vm137, 1.0, %v128
    %v148 = vsel %vm137, 1.0, %v129
    %v149 = vsel %vm137, 1.0, %v130
    %v150 = vsel %vm137, 1.0, %v131
    %v151 = vsel %vm137, 1.0, %v132
    %v152 = vsel %vm137, 1.0, %v133
    %v153 = vsel %vm137, 1.0, %v134
    %v154 = vpack.c.bf16 %v139, %v138
    %v155 = vpack.c.bf16 %v141, %v140
    %v156 = vpack.c.bf16 %v143, %v142
    %v157 = vpack.c.bf16 %v145, %v144
    %v158 = vpack.c.bf16 %v147, %v146
    %v159 = vpack.c.bf16 %v149, %v148
    %v160 = vpack.c.bf16 %v151, %v150
    %v161 = vpack.c.bf16 %v153, %v152
    %v170 = vunpack.c.l.b16 %v154
    %v171 = vunpack.c.h.b16 %v154
    %v172 = vunpack.c.l.b16 %v155
    %v173 = vunpack.c.h.b16 %v155
    %v174 = vunpack.c.l.b16 %v156
    %v175 = vunpack.c.h.b16 %v156
    %v176 = vunpack.c.l.b16 %v157
    %v177 = vunpack.c.h.b16 %v157
    %v178 = vunpack.c.l.b16 %v158
    %v179 = vunpack.c.h.b16 %v158
    %v180 = vunpack.c.l.b16 %v159
    %v181 = vunpack.c.h.b16 %v159
    %v182 = vunpack.c.l.b16 %v160
    %v183 = vunpack.c.h.b16 %v160
    %v184 = vunpack.c.l.b16 %v161
    %v185 = vunpack.c.h.b16 %v161
    %v186 = vpack.c.b16 %v170, %v170
    %v187 = vpack.c.b16 %v171, %v171
    %v188 = vpack.c.b16 %v172, %v172
    %v189 = vpack.c.b16 %v173, %v173
    %v190 = vpack.c.b16 %v174, %v174
    %v191 = vpack.c.b16 %v175, %v175
    %v192 = vpack.c.b16 %v176, %v176
    %v193 = vpack.c.b16 %v177, %v177
    %v194 = vpack.c.b16 %v178, %v178
    %v195 = vpack.c.b16 %v179, %v179
    %v196 = vpack.c.b16 %v180, %v180
    %v197 = vpack.c.b16 %v181, %v181
    %v198 = vpack.c.b16 %v182, %v182
    %v199 = vpack.c.b16 %v183, %v183
    %v200 = vpack.c.b16 %v184, %v184
    %v201 = vpack.c.b16 %v185, %v185
    %218 = vst [vmem:[#allocation5] sm:$0xf] %v186
    %219 = vst [vmem:[#allocation5 + $0x4] sm:$0xf] %v187
    %220 = vst [vmem:[#allocation5 + $0x8] sm:$0xf] %v188
    %221 = vst [vmem:[#allocation5 + $0xc] sm:$0xf] %v189
    %222 = vst [vmem:[#allocation5 + $0x10] sm:$0xf] %v190
    %223 = vst [vmem:[#allocation5 + $0x14] sm:$0xf] %v191
    %224 = vst [vmem:[#allocation5 + $0x18] sm:$0xf] %v192
    %225 = vst [vmem:[#allocation5 + $0x1c] sm:$0xf] %v193
    %226 = vst [vmem:[#allocation5 + $0x20] sm:$0xf] %v194
    %227 = vst [vmem:[#allocation5 + $0x24] sm:$0xf] %v195
    %228 = vst [vmem:[#allocation5 + $0x28] sm:$0xf] %v196
    %229 = vst [vmem:[#allocation5 + $0x2c] sm:$0xf] %v197
    %230 = vst [vmem:[#allocation5 + $0x30] sm:$0xf] %v198
    %231 = vst [vmem:[#allocation5 + $0x34] sm:$0xf] %v199
    %232 = vst [vmem:[#allocation5 + $0x38] sm:$0xf] %v200
    %233 = vst [vmem:[#allocation5 + $0x3c] sm:$0xf] %v201
    // Predicated region
    $region10: #{tpu_custom_call.1} parent=1 // pred_check
      _
    $region11: #{tpu_custom_call.1} parent=1 // pred_check_branch
      %235 = sbr.rel (0) target = $region13
    $region12: #{tpu_custom_call.1} parent=1 // pred_region
      %s237 = ssub.s32 1024, 1024
      %238 = vsyncadd [#allocation4], %s237
      %s239 = sshll.u32 [#allocation5], 4
      %s240 = int_to_ptr.vmem [resolvable:$true] %s239
      %245 = dma.vmem_to_hbm [thread:$0]  %s240, 1024, %s1, [#allocation4], 64, 64, 4
    $region13: #{tpu_custom_call.1} parent=1 // pred_fallthru
      _
    // Predicated region
    $region14: #{tpu_custom_call.1} parent=1 // pred_check
      _
    $region15: #{tpu_custom_call.1} parent=1 // pred_check_branch
      %247 = sbr.rel (0) target = $region17
    $region16: #{tpu_custom_call.1} parent=1 // pred_region
      %248 = dma.done [#allocation4], 1024
    $region17: #{tpu_custom_call.1} parent=1 // pred_fallthru
      _
    %249 = vsyncpa [#allocation3], 1
    %250 = vsyncpa [#allocation4], 1

</llo_original>
